<compile_context>
chip_gen: v7x
topology: tpu7x:2x2x1
jax: 0.10.0
libtpu: 0.0.40
codegen_flags: <defaults>
</compile_context>

<pallas_src>
import jax
import jax.numpy as jnp
from jax.experimental import pallas as pl
from jax.experimental.pallas import tpu as pltpu

LANE = 128      # lane width of a TPU vreg (last dim)
SUBLANE = 8     # sublane width (second-to-last dim)


def _ceil_to(n, m):
    return ((n + m - 1) // m) * m


def _pad2d(a, rows, cols):
    r, c = a.shape
    if (r, c) == (rows, cols):
        return a
    return jnp.pad(a, ((0, rows - r), (0, cols - c)))


# ----------------------------------------------------------------------------
# Fused Pallas kernel:  y = (relu(relu(x@W1+b1)@W2+b2))@W3 + b3
# All intermediates stay in vregs/VMEM; nothing but x and y touches HBM.
# ----------------------------------------------------------------------------
def _fused_mlp_kernel(x_ref, w1_ref, b1_ref, w2_ref, b2_ref, w3_ref, b3_ref,
                      o_ref):
    # MXU operands in the weight dtype (bf16 by default); f32 accumulation.
    cdt = w1_ref.dtype
    h = jnp.dot(x_ref[...].astype(cdt), w1_ref[...],
                preferred_element_type=jnp.float32)
    h = jnp.maximum(h + b1_ref[...], 0.0)          # bias/ReLU in f32
    h = jnp.dot(h.astype(cdt), w2_ref[...],
                preferred_element_type=jnp.float32)
    h = jnp.maximum(h + b2_ref[...], 0.0)
    h = jnp.dot(h.astype(cdt), w3_ref[...],
                preferred_element_type=jnp.float32)
    o_ref[...] = (h + b3_ref[...]).astype(o_ref.dtype)


def _fused_mlp_call(x, w1, b1, w2, b2, w3, b3, *, batch_block, out_dtype,
                    vmem_limit_bytes=None):
    """x: (Bp, K) unpadded features; weights lane-padded; out (Bp, 128)."""
    bp, din = x.shape
    dout = w3.shape[1]            # lane-padded output width (128)
    args = (x, w1, b1, w2, b2, w3, b3)

    if bp <= batch_block:
        # Small batch: launch-latency bound.  One grid-less call, every
        # operand pinned whole into VMEM.
        vmem = pl.BlockSpec(memory_space=pltpu.MemorySpace.VMEM)
        return pl.pallas_call(
            _fused_mlp_kernel,
            out_shape=jax.ShapeDtypeStruct((bp, dout), out_dtype),
            in_specs=[vmem] * len(args),
            out_specs=vmem,
        )(*args)

    # Large batch: tile only the batch axis ("parallel" -> v7x 2-TC split);
    # weights/biases keep a constant block index so they stay VMEM-resident.
    resident = lambda i: (0, 0)
    compiler_params = pltpu.CompilerParams(
        dimension_semantics=("parallel",),
        vmem_limit_bytes=vmem_limit_bytes,
    )
    return pl.pallas_call(
        _fused_mlp_kernel,
        out_shape=jax.ShapeDtypeStruct((bp, dout), out_dtype),
        grid=(bp // batch_block,),
        in_specs=[
            pl.BlockSpec((batch_block, din), lambda i: (i, 0)),   # x: true K
            pl.BlockSpec(w1.shape, resident),
            pl.BlockSpec(b1.shape, resident),
            pl.BlockSpec(w2.shape, resident),
            pl.BlockSpec(b2.shape, resident),
            pl.BlockSpec(w3.shape, resident),
            pl.BlockSpec(b3.shape, resident),
        ],
        out_specs=pl.BlockSpec((batch_block, dout), lambda i: (i, 0)),
        compiler_params=compiler_params,
    )(*args)


# ----------------------------------------------------------------------------
# Layer: the whole Linear/ReLU stack fused into one Pallas kernel.
# ----------------------------------------------------------------------------
class FusedMLP:
    """Linear(+ReLU) x3, one pallas_call, weights lane-padded & bf16."""

    def __init__(self, w1, b1, w2, b2, w3, b3, *, batch_block=2048,
                 param_dtype=jnp.bfloat16, out_dtype=jnp.float32,
                 vmem_limit_bytes=None):
        assert batch_block % 256 == 0, "keep M tiles MXU-aligned"
        self.in_features = w1.shape[0]
        self.out_features = w3.shape[1]
        self.batch_block = batch_block
        self.out_dtype = out_dtype          # bf16 here halves output writeback
        self.vmem_limit_bytes = vmem_limit_bytes

        d1 = _ceil_to(w1.shape[1], LANE)    # hidden widths padded to 128 lanes
        d2 = _ceil_to(w2.shape[1], LANE)
        d3 = _ceil_to(w3.shape[1], LANE)

        # W1 keeps its true K (= data_size) so the x HBM stream stays unpadded;
        # only N / hidden dims are zero-padded (padded columns are inert through
        # matmul + bias + ReLU).  Weights in bf16, biases stay f32 (added to the
        # f32 accumulator for free).
        self.w1 = _pad2d(w1, w1.shape[0], d1).astype(param_dtype)
        self.b1 = _pad2d(b1.reshape(1, -1), 1, d1).astype(jnp.float32)
        self.w2 = _pad2d(w2, d1, d2).astype(param_dtype)
        self.b2 = _pad2d(b2.reshape(1, -1), 1, d2).astype(jnp.float32)
        self.w3 = _pad2d(w3, d2, d3).astype(param_dtype)
        self.b3 = _pad2d(b3.reshape(1, -1), 1, d3).astype(jnp.float32)

    def __call__(self, x):
        b, din = x.shape
        assert din == self.in_features
        if b <= self.batch_block:
            bp = _ceil_to(max(b, SUBLANE), SUBLANE)
        else:
            bp = _ceil_to(b, self.batch_block)   # wasteful if not a multiple,
                                                 # but correct (rows discarded)
        if bp != b:
            x = jnp.pad(x, ((0, bp - b), (0, 0)))   # batch-only pad (no lanes)
        y_pad = _fused_mlp_call(
            x, self.w1, self.b1, self.w2, self.b2, self.w3, self.b3,
            batch_block=self.batch_block, out_dtype=self.out_dtype,
            vmem_limit_bytes=self.vmem_limit_bytes)
        return y_pad[:b, :self.out_features]


# ----------------------------------------------------------------------------
# `Net` sequential container (same forward semantics as the PyTorch module).
# ----------------------------------------------------------------------------
class Net:
    def __init__(self, layers, data_size):
        self.data_size = data_size
        self.layers = layers

    def forward(self, x):
        for layer in self.layers:
            x = layer(x)
            if type(x) is tuple:   # some layers (e.g. LSTM) return tuples
                x = x[0]
        return x

    __call__ = forward


# ----------------------------------------------------------------------------
# Deterministic parameter init + example run
# ----------------------------------------------------------------------------
def make_net(key, data_size=32, hidden=64, out=16, batch_block=2048):
    k1, k2, k3, k4, k5, k6 = jax.random.split(key, 6)
    s1 = 1.0 / jnp.sqrt(data_size)
    s2 = 1.0 / jnp.sqrt(hidden)

    w1 = jax.random.uniform(k1, (data_size, hidden), jnp.float32, -s1, s1)
    b1 = jax.random.uniform(k2, (hidden,), jnp.float32, -s1, s1)
    w2 = jax.random.uniform(k3, (hidden, hidden), jnp.float32, -s2, s2)
    b2 = jax.random.uniform(k4, (hidden,), jnp.float32, -s2, s2)
    w3 = jax.random.uniform(k5, (hidden, out), jnp.float32, -s2, s2)
    b3 = jax.random.uniform(k6, (out,), jnp.float32, -s2, s2)

    net = Net([FusedMLP(w1, b1, w2, b2, w3, b3, batch_block=batch_block)],
              data_size)
    raw = (w1, b1, w2, b2, w3, b3)
    return net, raw


if __name__ == "__main__":
    key = jax.random.PRNGKey(0)
    net_key, x_key, xb_key = jax.random.split(key, 3)

    batch, data_size, hidden, out = 8, 32, 64, 16
    net, (w1, b1, w2, b2, w3, b3) = make_net(net_key, data_size=data_size,
                                             hidden=hidden, out=out)

    # References in plain JAX.
    def ref_f32(xx):
        h = jnp.maximum(xx @ w1 + b1, 0.0)
        h = jnp.maximum(h @ w2 + b2, 0.0)
        return h @ w3 + b3

    def ref_mixed(xx):   # same bf16-operand / f32-accumulate discipline
        cdt = jnp.bfloat16
        h = jnp.dot(xx.astype(cdt), w1.astype(cdt),
                    preferred_element_type=jnp.float32) + b1
        h = jnp.maximum(h, 0.0)
        h = jnp.dot(h.astype(cdt), w2.astype(cdt),
                    preferred_element_type=jnp.float32) + b2
        h = jnp.maximum(h, 0.0)
        return jnp.dot(h.astype(cdt), w3.astype(cdt),
                       preferred_element_type=jnp.float32) + b3

    fwd = jax.jit(net)

    # Small batch: grid-less VMEM-resident path (launch-latency bound).
    x = jax.random.normal(x_key, (batch, data_size), dtype=jnp.float32)
    y = fwd(x)
    jax.block_until_ready(y)
    assert y.shape == (batch, out)
    assert jnp.allclose(y, ref_mixed(x), atol=2e-3, rtol=2e-3)
    assert jnp.allclose(y, ref_f32(x), atol=6e-2, rtol=6e-2)

    # Large batch: tiled path, grid=(4,) so both v7x TensorCores get >=2 steps.
    big = 8192
    xb = jax.random.normal(xb_key, (big, data_size), dtype=jnp.float32)
    yb = fwd(xb)
    jax.block_until_ready(yb)
    assert yb.shape == (big, out)
    assert jnp.allclose(yb, ref_mixed(xb), atol=2e-3, rtol=2e-3)
    assert jnp.allclose(yb, ref_f32(xb), atol=6e-2, rtol=6e-2)

    print("KERNEL_OK")
</pallas_src>

<mosaic_0001>
module attributes {stable_mosaic.version = 11 : i64} {
  func.func @_fused_mlp_kernel(%arg0: memref<8x32xf32, #tpu.memory_space<vmem>>, %arg1: memref<32x128xbf16, #tpu.memory_space<vmem>>, %arg2: memref<1x128xf32, #tpu.memory_space<vmem>>, %arg3: memref<128x128xbf16, #tpu.memory_space<vmem>>, %arg4: memref<1x128xf32, #tpu.memory_space<vmem>>, %arg5: memref<128x128xbf16, #tpu.memory_space<vmem>>, %arg6: memref<1x128xf32, #tpu.memory_space<vmem>>, %arg7: memref<8x128xf32, #tpu.memory_space<vmem>>) attributes {dimension_semantics = [], scalar_prefetch = 0 : i64, scratch_operands = 0 : i64, tpu.core_type = #tpu.core_type<tc>} {
    %c0 = arith.constant 0 : index
    %c0_0 = arith.constant 0 : index
    %0 = vector.load %arg0[%c0, %c0_0] : memref<8x32xf32, #tpu.memory_space<vmem>>, vector<8x32xf32>
    %1 = arith.truncf %0 : vector<8x32xf32> to vector<8x32xbf16>
    %c0_1 = arith.constant 0 : index
    %c0_2 = arith.constant 0 : index
    %2 = vector.load %arg1[%c0_1, %c0_2] : memref<32x128xbf16, #tpu.memory_space<vmem>>, vector<32x128xbf16>
    %cst = arith.constant dense<0.000000e+00> : vector<8x128xf32>
    %3 = tpu.matmul %1, %2, %cst {dimension_numbers = #tpu.dot_dimension_numbers<[1], [0], [0], [1], [0, 0, 1, 1], [], []>} : vector<8x32xbf16>, vector<32x128xbf16>, vector<8x128xf32> -> vector<8x128xf32>
    %c0_3 = arith.constant 0 : index
    %c0_4 = arith.constant 0 : index
    %4 = vector.load %arg2[%c0_3, %c0_4] : memref<1x128xf32, #tpu.memory_space<vmem>>, vector<1x128xf32>
    %5 = vector.broadcast %4 : vector<1x128xf32> to vector<8x128xf32>
    %6 = arith.addf %3, %5 : vector<8x128xf32>
    %cst_5 = arith.constant 0.000000e+00 : f32
    %7 = vector.broadcast %cst_5 : f32 to vector<8x128xf32>
    %8 = arith.maximumf %6, %7 : vector<8x128xf32>
    %9 = arith.truncf %8 : vector<8x128xf32> to vector<8x128xbf16>
    %c0_6 = arith.constant 0 : index
    %c0_7 = arith.constant 0 : index
    %10 = vector.load %arg3[%c0_6, %c0_7] : memref<128x128xbf16, #tpu.memory_space<vmem>>, vector<128x128xbf16>
    %cst_8 = arith.constant dense<0.000000e+00> : vector<8x128xf32>
    %11 = tpu.matmul %9, %10, %cst_8 {dimension_numbers = #tpu.dot_dimension_numbers<[1], [0], [0], [1], [0, 0, 1, 1], [], []>} : vector<8x128xbf16>, vector<128x128xbf16>, vector<8x128xf32> -> vector<8x128xf32>
    %c0_9 = arith.constant 0 : index
    %c0_10 = arith.constant 0 : index
    %12 = vector.load %arg4[%c0_9, %c0_10] : memref<1x128xf32, #tpu.memory_space<vmem>>, vector<1x128xf32>
    %13 = vector.broadcast %12 : vector<1x128xf32> to vector<8x128xf32>
    %14 = arith.addf %11, %13 : vector<8x128xf32>
    %cst_11 = arith.constant 0.000000e+00 : f32
    %15 = vector.broadcast %cst_11 : f32 to vector<8x128xf32>
    %16 = arith.maximumf %14, %15 : vector<8x128xf32>
    %17 = arith.truncf %16 : vector<8x128xf32> to vector<8x128xbf16>
    %c0_12 = arith.constant 0 : index
    %c0_13 = arith.constant 0 : index
    %18 = vector.load %arg5[%c0_12, %c0_13] : memref<128x128xbf16, #tpu.memory_space<vmem>>, vector<128x128xbf16>
    %cst_14 = arith.constant dense<0.000000e+00> : vector<8x128xf32>
    %19 = tpu.matmul %17, %18, %cst_14 {dimension_numbers = #tpu.dot_dimension_numbers<[1], [0], [0], [1], [0, 0, 1, 1], [], []>} : vector<8x128xbf16>, vector<128x128xbf16>, vector<8x128xf32> -> vector<8x128xf32>
    %c0_15 = arith.constant 0 : index
    %c0_16 = arith.constant 0 : index
    %20 = vector.load %arg6[%c0_15, %c0_16] : memref<1x128xf32, #tpu.memory_space<vmem>>, vector<1x128xf32>
    %21 = vector.broadcast %20 : vector<1x128xf32> to vector<8x128xf32>
    %22 = arith.addf %19, %21 : vector<8x128xf32>
    %c0_17 = arith.constant 0 : index
    %c0_18 = arith.constant 0 : index
    %23 = vector.load %arg7[%c0_17, %c0_18] : memref<8x128xf32, #tpu.memory_space<vmem>>, vector<8x128xf32>
    tpu.vector_store %arg7[%c0_17, %c0_18], %22 {strides = array<i32>} : memref<8x128xf32, #tpu.memory_space<vmem>>, vector<8x128xf32>,
    return
  }
}

</mosaic_0001>

<llo_original>
// kernel: _unnamed_function_.1
$region0: #{_unnamed_function_.1}
  #allocation0 [shape = 'u32[]', space=smem, size = 0x4, offset = 0x4, fixed_abs, tag = 'smem constant byte address 0x4 - core index']
  #allocation1 [shape = 'u32[144,128]{1,0:T(1,128)}', space=vmem, size = 0x12000, scoped, tag = 'internal scratch']
  %s0 = inlined_call_operand.vmem [shape: f32[8,32], index: 0, kind: input, shape index: {}]
  %s1 = inlined_call_operand.vmem [shape: bf16[32,128], index: 1, kind: input, shape index: {}]
  %s2 = inlined_call_operand.hbm [shape: f32[1,128], index: 2, kind: input, shape index: {}]
  %s3 = inlined_call_operand.hbm [shape: bf16[128,128], index: 3, kind: input, shape index: {}]
  %s4 = inlined_call_operand.vmem [shape: f32[1,128], index: 4, kind: input, shape index: {}]
  %s5 = inlined_call_operand.hbm [shape: bf16[128,128], index: 5, kind: input, shape index: {}]
  %s6 = inlined_call_operand.vmem [shape: f32[1,128], index: 6, kind: input, shape index: {}]
  %s7 = inlined_call_operand.hbm [shape: f32[8,128], index: 7, kind: output, shape index: {}]
  %s8 = sld [smem:[#allocation0]]
  $region50: #{_unnamed_function_.1} parent=0
    _
  %s10 = ssub.s32 1, %s8
  %s11 = scalar_select 0, %s10, %s8
  $region1: #{_unnamed_function_.1} parent=0
    #allocation2 [shape = 'u8[512]{0}', space=vmem, size = 0x400, scoped, tag = 'input window, operand 2, single buffered']
    #allocation3 [shape = 's32[1]{0}', space=sflag, size = 0x4, scoped, tag = 'scoped memory for _unnamed_function_.1']
    #allocation4 [shape = 's32[1]{0}', space=sflag, size = 0x4, scoped, tag = 'scoped memory for _unnamed_function_.1']
    #allocation5 [shape = 'u8[32768]{0}', space=vmem, size = 0x8000, scoped, tag = 'input window, operand 3, single buffered']
    #allocation6 [shape = 's32[1]{0}', space=sflag, size = 0x4, scoped, tag = 'scoped memory for _unnamed_function_.1']
    #allocation7 [shape = 'u8[32768]{0}', space=vmem, size = 0x8000, scoped, tag = 'input window, operand 5, single buffered']
    #allocation8 [shape = 'u8[4096]{0}', space=vmem, size = 0x1000, scoped, tag = 'output window, operand 0, single buffered']
    %12 = vsyncpa [#allocation3], 0
    %13 = vsyncpa [#allocation6], 0
    %14 = vsyncpa [#allocation4], 0
    // Predicated region
    $region2: #{_unnamed_function_.1} parent=1 // pred_check
      _
    $region3: #{_unnamed_function_.1} parent=1 // pred_check_branch
      %16 = sbr.rel (0) target = $region5
    $region4: #{_unnamed_function_.1} parent=1 // pred_region
      _
    $region5: #{_unnamed_function_.1} parent=1 // pred_fallthru
      _
    // Predicated region
    $region6: #{_unnamed_function_.1} parent=1 // pred_check
      _
    $region7: #{_unnamed_function_.1} parent=1 // pred_check_branch
      %18 = sbr.rel (0) target = $region9
    $region8: #{_unnamed_function_.1} parent=1 // pred_region
      _
    $region9: #{_unnamed_function_.1} parent=1 // pred_fallthru
      _
    // Predicated region
    $region10: #{_unnamed_function_.1} parent=1 // pred_check
      _
    $region11: #{_unnamed_function_.1} parent=1 // pred_check_branch
      %20 = sbr.rel (0) target = $region13
    $region12: #{_unnamed_function_.1} parent=1 // pred_region
      %s22 = ssub.s32 16, 16
      %23 = vsyncadd [#allocation3], %s22
      %s25 = sshll.u32 [#allocation2], 4
      %s26 = int_to_ptr.vmem [resolvable:$true] %s25
      %28 = dma.hbm_to_vmem [thread:$0]  %s2, 16, %s26, [#allocation3]
    $region13: #{_unnamed_function_.1} parent=1 // pred_fallthru
      _
    // Predicated region
    $region14: #{_unnamed_function_.1} parent=1 // pred_check
      _
    $region15: #{_unnamed_function_.1} parent=1 // pred_check_branch
      %30 = sbr.rel (0) target = $region17
    $region16: #{_unnamed_function_.1} parent=1 // pred_region
      %s32 = ssub.s32 1024, 1024
      %33 = vsyncadd [#allocation6], %s32
      %s34 = sshll.u32 [#allocation5], 4
      %s35 = int_to_ptr.vmem [resolvable:$true] %s34
      %40 = dma.hbm_to_vmem [thread:$0]  %s3, 1024, %s35, [#allocation6], 64, 64, 4
    $region17: #{_unnamed_function_.1} parent=1 // pred_fallthru
      _
    // Predicated region
    $region18: #{_unnamed_function_.1} parent=1 // pred_check
      _
    $region19: #{_unnamed_function_.1} parent=1 // pred_check_branch
      %42 = sbr.rel (0) target = $region21
    $region20: #{_unnamed_function_.1} parent=1 // pred_region
      _
    $region21: #{_unnamed_function_.1} parent=1 // pred_fallthru
      _
    // Predicated region
    $region22: #{_unnamed_function_.1} parent=1 // pred_check
      _
    $region23: #{_unnamed_function_.1} parent=1 // pred_check_branch
      %44 = sbr.rel (0) target = $region25
    $region24: #{_unnamed_function_.1} parent=1 // pred_region
      %s46 = ssub.s32 1024, 1024
      %47 = vsyncadd [#allocation6], %s46
      %s48 = sshll.u32 [#allocation7], 4
      %s49 = int_to_ptr.vmem [resolvable:$true] %s48
      %54 = dma.hbm_to_vmem [thread:$0]  %s5, 1024, %s49, [#allocation6], 64, 64, 4
    $region25: #{_unnamed_function_.1} parent=1 // pred_fallthru
      _
    // Predicated region
    $region26: #{_unnamed_function_.1} parent=1 // pred_check
      _
    $region27: #{_unnamed_function_.1} parent=1 // pred_check_branch
      %56 = sbr.rel (0) target = $region29
    $region28: #{_unnamed_function_.1} parent=1 // pred_region
      _
    $region29: #{_unnamed_function_.1} parent=1 // pred_fallthru
      _
    // Predicated region
    $region30: #{_unnamed_function_.1} parent=1 // pred_check
      _
    $region31: #{_unnamed_function_.1} parent=1 // pred_check_branch
      %58 = sbr.rel (0) target = $region33
    $region32: #{_unnamed_function_.1} parent=1 // pred_region
      %59 = dma.done [#allocation3], 16
    $region33: #{_unnamed_function_.1} parent=1 // pred_fallthru
      _
    // Predicated region
    $region34: #{_unnamed_function_.1} parent=1 // pred_check
      _
    $region35: #{_unnamed_function_.1} parent=1 // pred_check_branch
      %61 = sbr.rel (0) target = $region37
    $region36: #{_unnamed_function_.1} parent=1 // pred_region
      %62 = dma.done [#allocation6], 1024
    $region37: #{_unnamed_function_.1} parent=1 // pred_fallthru
      _
    // Predicated region
    $region38: #{_unnamed_function_.1} parent=1 // pred_check
      _
    $region39: #{_unnamed_function_.1} parent=1 // pred_check_branch
      %64 = sbr.rel (0) target = $region41
    $region40: #{_unnamed_function_.1} parent=1 // pred_region
      %65 = dma.done [#allocation6], 1024
    $region41: #{_unnamed_function_.1} parent=1 // pred_fallthru
      _
    %v67 = vld [vmem:[%s0] sm:$0xff]
    %v68 = vpack.c.bf16 %v67, %v67
    %v69 = vld [vmem:[%s1] sm:$0xf]
    %v70 = vld [vmem:[%s1 + $0x4] sm:$0xf]
    %v71 = vld [vmem:[%s1 + $0x8] sm:$0xf]
    %v72 = vld [vmem:[%s1 + $0xc] sm:$0xf]
    %v73 = vld [vmem:[#allocation2] sm:$0x1]
    %v75 = vlaneseq
    %v76 = vshrl.u32 %v75, 7
    %v77 = vsub.s32 0, %v76
    %v78 = vrot.slane %v73, %v77
    %v84 = vunpack.c.l.b16 %v69
    %v85 = vunpack.c.l.b16 %v70
    %v86 = vunpack.c.l.b16 %v71
    %v87 = vunpack.c.l.b16 %v72
    %v88 = vpack.c.b16 %v85, %v84
    %v89 = vpack.c.b16 %v87, %v86
    %vm92 = vcmask 261120
    %v94 = vsel %vm92, %v68, 0
    %96 = vmatprep.subr.bf16.mxu0 0
    %97 = vmatpush1.bf16.msra.mxu0 %v88
    %98 = vmatprep.subr.bf16.mxu0 0
    %99 = vmatpush1.bf16.msra.mxu0 %v89
    %100 = vmatprep.subr.bf16.mxu0 0
    %101 = vmatpush1.bf16.msra.mxu0 0
    %102 = vmatprep.subr.bf16.mxu0 0
    %103 = vmatpush1.bf16.msra.mxu0 0
    %104 = vmatprep.subr.bf16.mxu0 0
    %105 = vmatpush1.bf16.msra.mxu0 0
    %106 = vmatprep.subr.bf16.mxu0 0
    %107 = vmatpush1.bf16.msra.mxu0 0
    %108 = vmatprep.subr.bf16.mxu0 0
    %109 = vmatpush1.bf16.msra.mxu0 0
    %110 = vmatprep.subr.bf16.mxu0 0
    %111 = vmatpush1.bf16.msra.mxu0 0
    %112 = vmatprep.subr.bf16.mxu0 0
    %113 = vmatpush1.bf16.msra.mxu0 0
    %114 = vmatprep.subr.bf16.mxu0 0
    %115 = vmatpush1.bf16.msra.mxu0 0
    %116 = vmatprep.subr.bf16.mxu0 0
    %117 = vmatpush1.bf16.msra.mxu0 0
    %118 = vmatprep.subr.bf16.mxu0 0
    %119 = vmatpush1.bf16.msra.mxu0 0
    %120 = vmatprep.subr.bf16.mxu0 0
    %121 = vmatpush1.bf16.msra.mxu0 0
    %122 = vmatprep.subr.bf16.mxu0 0
    %123 = vmatpush1.bf16.msra.mxu0 0
    %124 = vmatprep.subr.bf16.mxu0 0
    %125 = vmatpush1.bf16.msra.mxu0 0
    %126 = vmatprep.subr.bf16.mxu0 0
    %127 = vmatpush1.bf16.msra.mxu0 0
    %128 = vmatprep.mubr.bf16.mxu0 0
    %129 = vmatmul.mubr.bf16.gmra.mrb[0].mxu0 %v94
    %v130 = vpop.f32.mrb[0].mxu0
    %v131 = vadd.f32 %v78, %v130
    %v132 = vpop.f32.mrb[0].mxu0
    %v133 = vpop.f32.mrb[0].mxu0
    %v134 = vpop.f32.mrb[0].mxu0
    %135 = vdwg.mxu0
    %v136 = vmax.f32 %v131, 0.0
    %v137 = vpack.c.bf16 %v136, %v136
    %v138 = vld [vmem:[#allocation5] sm:$0xf]
    %v139 = vld [vmem:[#allocation5 + $0x4] sm:$0xf]
    %v140 = vld [vmem:[#allocation5 + $0x8] sm:$0xf]
    %v141 = vld [vmem:[#allocation5 + $0xc] sm:$0xf]
    %v142 = vld [vmem:[#allocation5 + $0x10] sm:$0xf]
    %v143 = vld [vmem:[#allocation5 + $0x14] sm:$0xf]
    %v144 = vld [vmem:[#allocation5 + $0x18] sm:$0xf]
    %v145 = vld [vmem:[#allocation5 + $0x1c] sm:$0xf]
    %v146 = vld [vmem:[#allocation5 + $0x20] sm:$0xf]
    %v147 = vld [vmem:[#allocation5 + $0x24] sm:$0xf]
    %v148 = vld [vmem:[#allocation5 + $0x28] sm:$0xf]
    %v149 = vld [vmem:[#allocation5 + $0x2c] sm:$0xf]
    %v150 = vld [vmem:[#allocation5 + $0x30] sm:$0xf]
    %v151 = vld [vmem:[#allocation5 + $0x34] sm:$0xf]
    %v152 = vld [vmem:[#allocation5 + $0x38] sm:$0xf]
    %v153 = vld [vmem:[#allocation5 + $0x3c] sm:$0xf]
    %v154 = vld [vmem:[%s4] sm:$0x1]
    %v156 = vlaneseq
    %v157 = vshrl.u32 %v156, 7
    %v158 = vsub.s32 0, %v157
    %v159 = vrot.slane %v154, %v158
    %v177 = vunpack.c.l.b16 %v138
    %v178 = vunpack.c.l.b16 %v139
    %v179 = vunpack.c.l.b16 %v140
    %v180 = vunpack.c.l.b16 %v141
    %v181 = vunpack.c.l.b16 %v142
    %v182 = vunpack.c.l.b16 %v143
    %v183 = vunpack.c.l.b16 %v144
    %v184 = vunpack.c.l.b16 %v145
    %v185 = vunpack.c.l.b16 %v146
    %v186 = vunpack.c.l.b16 %v147
    %v187 = vunpack.c.l.b16 %v148
    %v188 = vunpack.c.l.b16 %v149
    %v189 = vunpack.c.l.b16 %v150
    %v190 = vunpack.c.l.b16 %v151
    %v191 = vunpack.c.l.b16 %v152
    %v192 = vunpack.c.l.b16 %v153
    %v193 = vpack.c.b16 %v178, %v177
    %v194 = vpack.c.b16 %v180, %v179
    %v195 = vpack.c.b16 %v182, %v181
    %v196 = vpack.c.b16 %v184, %v183
    %v197 = vpack.c.b16 %v186, %v185
    %v198 = vpack.c.b16 %v188, %v187
    %v199 = vpack.c.b16 %v190, %v189
    %v200 = vpack.c.b16 %v192, %v191
    %209 = vmatprep.subr.bf16.mxu0 0
    %210 = vmatpush1.bf16.msra.mxu0 %v193
    %211 = vmatprep.subr.bf16.mxu0 0
    %212 = vmatpush1.bf16.msra.mxu0 %v194
    %213 = vmatprep.subr.bf16.mxu0 0
    %214 = vmatpush1.bf16.msra.mxu0 %v195
    %215 = vmatprep.subr.bf16.mxu0 0
    %216 = vmatpush1.bf16.msra.mxu0 %v196
    %217 = vmatprep.subr.bf16.mxu0 0
    %218 = vmatpush1.bf16.msra.mxu0 %v197
    %219 = vmatprep.subr.bf16.mxu0 0
    %220 = vmatpush1.bf16.msra.mxu0 %v198
    %221 = vmatprep.subr.bf16.mxu0 0
    %222 = vmatpush1.bf16.msra.mxu0 %v199
    %223 = vmatprep.subr.bf16.mxu0 0
    %224 = vmatpush1.bf16.msra.mxu0 %v200
    %225 = vmatprep.subr.bf16.mxu0 0
    %226 = vmatpush1.bf16.msra.mxu0 0
    %227 = vmatprep.subr.bf16.mxu0 0
    %228 = vmatpush1.bf16.msra.mxu0 0
    %229 = vmatprep.subr.bf16.mxu0 0
    %230 = vmatpush1.bf16.msra.mxu0 0
    %231 = vmatprep.subr.bf16.mxu0 0
    %232 = vmatpush1.bf16.msra.mxu0 0
    %233 = vmatprep.subr.bf16.mxu0 0
    %234 = vmatpush1.bf16.msra.mxu0 0
    %235 = vmatprep.subr.bf16.mxu0 0
    %236 = vmatpush1.bf16.msra.mxu0 0
    %237 = vmatprep.subr.bf16.mxu0 0
    %238 = vmatpush1.bf16.msra.mxu0 0
    %239 = vmatprep.subr.bf16.mxu0 0
    %240 = vmatpush1.bf16.msra.mxu0 0
    %241 = vmatprep.mubr.bf16.mxu0 0
    %242 = vmatmul.mubr.bf16.gmra.mrb[0].mxu0 %v137
    %v243 = vpop.f32.mrb[0].mxu0
    %v244 = vadd.f32 %v159, %v243
    %v245 = vpop.f32.mrb[0].mxu0
    %v246 = vpop.f32.mrb[0].mxu0
    %v247 = vpop.f32.mrb[0].mxu0
    %248 = vdwg.mxu0
    %v249 = vmax.f32 %v244, 0.0
    %v250 = vpack.c.bf16 %v249, %v249
    %v251 = vld [vmem:[#allocation7] sm:$0xf]
    %v252 = vld [vmem:[#allocation7 + $0x4] sm:$0xf]
    %v253 = vld [vmem:[#allocation7 + $0x8] sm:$0xf]
    %v254 = vld [vmem:[#allocation7 + $0xc] sm:$0xf]
    %v255 = vld [vmem:[#allocation7 + $0x10] sm:$0xf]
    %v256 = vld [vmem:[#allocation7 + $0x14] sm:$0xf]
    %v257 = vld [vmem:[#allocation7 + $0x18] sm:$0xf]
    %v258 = vld [vmem:[#allocation7 + $0x1c] sm:$0xf]
    %v259 = vld [vmem:[#allocation7 + $0x20] sm:$0xf]
    %v260 = vld [vmem:[#allocation7 + $0x24] sm:$0xf]
    %v261 = vld [vmem:[#allocation7 + $0x28] sm:$0xf]
    %v262 = vld [vmem:[#allocation7 + $0x2c] sm:$0xf]
    %v263 = vld [vmem:[#allocation7 + $0x30] sm:$0xf]
    %v264 = vld [vmem:[#allocation7 + $0x34] sm:$0xf]
    %v265 = vld [vmem:[#allocation7 + $0x38] sm:$0xf]
    %v266 = vld [vmem:[#allocation7 + $0x3c] sm:$0xf]
    %v267 = vld [vmem:[%s6] sm:$0x1]
    %v269 = vlaneseq
    %v270 = vshrl.u32 %v269, 7
    %v271 = vsub.s32 0, %v270
    %v272 = vrot.slane %v267, %v271
    %v290 = vunpack.c.l.b16 %v251
    %v291 = vunpack.c.l.b16 %v252
    %v292 = vunpack.c.l.b16 %v253
    %v293 = vunpack.c.l.b16 %v254
    %v294 = vunpack.c.l.b16 %v255
    %v295 = vunpack.c.l.b16 %v256
    %v296 = vunpack.c.l.b16 %v257
    %v297 = vunpack.c.l.b16 %v258
    %v298 = vunpack.c.l.b16 %v259
    %v299 = vunpack.c.l.b16 %v260
    %v300 = vunpack.c.l.b16 %v261
    %v301 = vunpack.c.l.b16 %v262
    %v302 = vunpack.c.l.b16 %v263
    %v303 = vunpack.c.l.b16 %v264
    %v304 = vunpack.c.l.b16 %v265
    %v305 = vunpack.c.l.b16 %v266
    %v306 = vpack.c.b16 %v291, %v290
    %v307 = vpack.c.b16 %v293, %v292
    %v308 = vpack.c.b16 %v295, %v294
    %v309 = vpack.c.b16 %v297, %v296
    %v310 = vpack.c.b16 %v299, %v298
    %v311 = vpack.c.b16 %v301, %v300
    %v312 = vpack.c.b16 %v303, %v302
    %v313 = vpack.c.b16 %v305, %v304
    %322 = vmatprep.subr.bf16.mxu0 0
    %323 = vmatpush1.bf16.msra.mxu0 %v306
    %324 = vmatprep.subr.bf16.mxu0 0
    %325 = vmatpush1.bf16.msra.mxu0 %v307
    %326 = vmatprep.subr.bf16.mxu0 0
    %327 = vmatpush1.bf16.msra.mxu0 %v308
    %328 = vmatprep.subr.bf16.mxu0 0
    %329 = vmatpush1.bf16.msra.mxu0 %v309
    %330 = vmatprep.subr.bf16.mxu0 0
    %331 = vmatpush1.bf16.msra.mxu0 %v310
    %332 = vmatprep.subr.bf16.mxu0 0
    %333 = vmatpush1.bf16.msra.mxu0 %v311
    %334 = vmatprep.subr.bf16.mxu0 0
    %335 = vmatpush1.bf16.msra.mxu0 %v312
    %336 = vmatprep.subr.bf16.mxu0 0
    %337 = vmatpush1.bf16.msra.mxu0 %v313
    %338 = vmatprep.subr.bf16.mxu0 0
    %339 = vmatpush1.bf16.msra.mxu0 0
    %340 = vmatprep.subr.bf16.mxu0 0
    %341 = vmatpush1.bf16.msra.mxu0 0
    %342 = vmatprep.subr.bf16.mxu0 0
    %343 = vmatpush1.bf16.msra.mxu0 0
    %344 = vmatprep.subr.bf16.mxu0 0
    %345 = vmatpush1.bf16.msra.mxu0 0
    %346 = vmatprep.subr.bf16.mxu0 0
    %347 = vmatpush1.bf16.msra.mxu0 0
    %348 = vmatprep.subr.bf16.mxu0 0
    %349 = vmatpush1.bf16.msra.mxu0 0
    %350 = vmatprep.subr.bf16.mxu0 0
    %351 = vmatpush1.bf16.msra.mxu0 0
    %352 = vmatprep.subr.bf16.mxu0 0
    %353 = vmatpush1.bf16.msra.mxu0 0
    %354 = vmatprep.mubr.bf16.mxu0 0
    %355 = vmatmul.mubr.bf16.gmra.mrb[0].mxu0 %v250
    %v356 = vpop.f32.mrb[0].mxu0
    %v357 = vadd.f32 %v272, %v356
    %v358 = vpop.f32.mrb[0].mxu0
    %v359 = vpop.f32.mrb[0].mxu0
    %v360 = vpop.f32.mrb[0].mxu0
    %361 = vdwg.mxu0
    %362 = vst [vmem:[#allocation8] sm:$0xff] %v357
    // Predicated region
    $region42: #{_unnamed_function_.1} parent=1 // pred_check
      _
    $region43: #{_unnamed_function_.1} parent=1 // pred_check_branch
      %364 = sbr.rel (0) target = $region45
    $region44: #{_unnamed_function_.1} parent=1 // pred_region
      %s366 = ssub.s32 128, 128
      %367 = vsyncadd [#allocation4], %s366
      %s369 = sshll.u32 [#allocation8], 4
      %s370 = int_to_ptr.vmem [resolvable:$true] %s369
      %372 = dma.vmem_to_hbm [thread:$0]  %s370, 128, %s7, [#allocation4]
    $region45: #{_unnamed_function_.1} parent=1 // pred_fallthru
      _
    // Predicated region
    $region46: #{_unnamed_function_.1} parent=1 // pred_check
      _
    $region47: #{_unnamed_function_.1} parent=1 // pred_check_branch
      %374 = sbr.rel (0) target = $region49
    $region48: #{_unnamed_function_.1} parent=1 // pred_region
      %375 = dma.done [#allocation4], 128
    $region49: #{_unnamed_function_.1} parent=1 // pred_fallthru
      _
    %376 = vsyncpa [#allocation3], 1
    %377 = vsyncpa [#allocation6], 1
    %378 = vsyncpa [#allocation4], 1

</llo_original>
